<compile_context>
chip_gen: v7x
topology: tpu7x:2x2x1
jax: 0.10.0
libtpu: 0.0.40
codegen_flags: <defaults>
</compile_context>

<pallas_src>
import jax
import jax.numpy as jnp
from jax.experimental import pallas as pl
from jax.experimental.pallas import tpu as pltpu

EPS = 1e-10


def _l2norm_kernel(x_ref, w_ref, o_ref):
    # x_ref: (B_blk, C, T) tile — channels on sublanes, spatial on lanes.
    # w_ref: (1, C, 1)  per-channel scale, same (full) block every grid step.
    x = x_ref[...].astype(jnp.float32)
    w = w_ref[...].astype(jnp.float32)
    sq_sum = jnp.sum(x * x, axis=1, keepdims=True)        # (B_blk, 1, T)
    # Exact divide: one sqrt + one divide per spatial location (eps added AFTER
    # the sqrt, matching the PyTorch reference).
    inv = 1.0 / (jnp.sqrt(sq_sum) + EPS)
    o_ref[...] = ((x * inv) * w).astype(o_ref.dtype)


def _round_up(a, b):
    return ((a + b - 1) // b) * b


def l2norm_pallas(x_nchw, weight, *, vmem_budget_bytes=6 * 1024 * 1024):
    """x_nchw: (N, C, H, W), weight: (C,).  Returns (N, C, H, W)."""
    N, C, H, W = x_nchw.shape
    HW = H * W
    itemsize = jnp.dtype(x_nchw.dtype).itemsize

    # Free views only — no jnp.pad, no output slice (each would add an HBM pass).
    x3 = x_nchw.reshape(N, C, HW)
    w3 = weight.reshape(1, C, 1)

    # ---- lane (spatial) tile: multiple of 128, near-even split of HW --------
    HW_128 = _round_up(HW, 128)
    max_t = max(128, (vmem_budget_bytes // (C * itemsize)) // 128 * 128)
    n_sp = pl.cdiv(HW_128, max_t)
    t_hw = _round_up(pl.cdiv(HW_128, n_sp), 128)          # <= max_t by construction
    sp_tiles = pl.cdiv(HW, t_hw)                          # ragged last tile OK

    # ---- batch sub-blocking: amortize per-step overhead on tiny HW ----------
    per_image_bytes = C * t_hw * itemsize
    b_max = max(1, min(N, vmem_budget_bytes // per_image_bytes))
    b_blk = 1
    for b in range(b_max, 0, -1):
        if N % b == 0 and ((N // b) * sp_tiles >= 2 or b == 1):
            b_blk = b
            break
    # v7x: if the grid still collapses to a single step (N==1, one wide spatial
    # tile), split the spatial axis in two so both TensorCores get work.
    if (N // b_blk) * sp_tiles < 2 and t_hw >= 256:
        t_hw = _round_up(pl.cdiv(t_hw, 2), 128)
        sp_tiles = pl.cdiv(HW, t_hw)

    grid = (N // b_blk, sp_tiles)
    block_bytes = b_blk * C * t_hw * itemsize
    # 2x double-buffered (in + out) blocks + weight, with headroom; stays under
    # v7x's 64 MiB physical VMEM.
    vmem_limit = min(64 * 1024 * 1024,
                     max(48 * 1024 * 1024, 4 * block_bytes + 2 * 1024 * 1024))

    out = pl.pallas_call(
        _l2norm_kernel,
        out_shape=jax.ShapeDtypeStruct((N, C, HW), x3.dtype),
        grid_spec=pltpu.PrefetchScalarGridSpec(
            num_scalar_prefetch=0,
            grid=grid,
            in_specs=[
                pl.BlockSpec((b_blk, C, t_hw), lambda n, j: (n, 0, j)),
                # Per-channel scale: full (tiny) block, constant index map.
                pl.BlockSpec((1, C, 1), lambda n, j: (0, 0, 0)),
            ],
            out_specs=pl.BlockSpec((b_blk, C, t_hw), lambda n, j: (n, 0, j)),
        ),
        compiler_params=pltpu.CompilerParams(
            dimension_semantics=("parallel", "parallel"),
            vmem_limit_bytes=vmem_limit,
        ),
        cost_estimate=pl.CostEstimate(
            flops=4 * N * C * HW,
            transcendentals=2 * N * HW,
            bytes_accessed=2 * N * C * HW * itemsize + C * itemsize,
        ),
    )(x3, w3)

    return out.reshape(N, C, H, W)


def l2norm_ref(x_nchw, weight):
    norm = jnp.sqrt(jnp.sum(x_nchw ** 2, axis=1, keepdims=True)) + EPS
    return (x_nchw / norm) * weight.reshape(1, -1, 1, 1)


if __name__ == "__main__":
    key = jax.random.PRNGKey(0)
    scale = 20.0

    # Small shapes consistent with the module's NCHW forward.  They exercise:
    # aligned C/HW, C not a multiple of 8, tiny C, and an SSD-like unaligned
    # spatial extent (ragged lane tile) with C=512.
    cases = [
        (2, 64, 16, 16),    # C % 8 == 0, H*W % 128 == 0
        (2, 24, 10, 10),    # H*W = 100 -> one ragged 128-lane tile
        (2, 4, 12, 12),     # C = 4 (full-dim sublane block); H*W = 144
        (2, 512, 19, 19),   # H*W = 361 -> one ragged 384-lane tile
    ]

    for idx, (N, C, H, W) in enumerate(cases):
        k = jax.random.fold_in(key, idx)
        x = jax.random.normal(k, (N, C, H, W), dtype=jnp.float32)
        # Deterministic parameter init: constant_(weight, scale)
        weight = jnp.full((C,), scale, dtype=jnp.float32)

        out = jax.block_until_ready(l2norm_pallas(x, weight))
        ref = l2norm_ref(x, weight)

        assert out.shape == (N, C, H, W)
        assert jnp.allclose(out, ref, atol=1e-4, rtol=1e-4), \
            f"mismatch vs reference for shape {(N, C, H, W)}"

    print("KERNEL_OK")
</pallas_src>

<mosaic_0001>
module attributes {stable_mosaic.version = 11 : i64} {
  func.func @_l2norm_kernel(%arg0: i32, %arg1: i32, %arg2: memref<1x64x256xf32, #tpu.memory_space<vmem>>, %arg3: memref<1x64x1xf32, #tpu.memory_space<vmem>>, %arg4: memref<1x64x256xf32, #tpu.memory_space<vmem>>) attributes {dimension_semantics = [#tpu.dimension_semantics<parallel>, #tpu.dimension_semantics<parallel>], iteration_bounds = array<i64: 2, 1>, scalar_prefetch = 0 : i64, scratch_operands = 0 : i64, tpu.core_type = #tpu.core_type<tc>, window_params = [{transform_indices = @transform_0, window_bounds = array<i64: 1, 64, 256>}, {pipeline_mode = #tpu.pipeline_mode<synchronous>, transform_indices = @transform_1, window_bounds = array<i64: 1, 64, 1>}, {transform_indices = @transform_2, window_bounds = array<i64: 1, 64, 256>}]} {
    %c0 = arith.constant 0 : index
    %c0_0 = arith.constant 0 : index
    %c0_1 = arith.constant 0 : index
    %0 = vector.load %arg2[%c0, %c0_0, %c0_1] : memref<1x64x256xf32, #tpu.memory_space<vmem>>, vector<1x64x256xf32>
    %c0_2 = arith.constant 0 : index
    %c0_3 = arith.constant 0 : index
    %c0_4 = arith.constant 0 : index
    %1 = vector.load %arg3[%c0_2, %c0_3, %c0_4] : memref<1x64x1xf32, #tpu.memory_space<vmem>>, vector<1x64x1xf32>
    %2 = arith.mulf %0, %0 : vector<1x64x256xf32>
    %cst = arith.constant dense<0.000000e+00> : vector<1x256xf32>
    %3 = vector.multi_reduction <add>, %2, %cst [1] : vector<1x64x256xf32> to vector<1x256xf32>
    %4 = vector.shape_cast %3 : vector<1x256xf32> to vector<1x1x256xf32>
    %5 = math.sqrt %4 : vector<1x1x256xf32>
    %cst_5 = arith.constant 1.000000e-10 : f32
    %6 = vector.broadcast %cst_5 : f32 to vector<1x1x256xf32>
    %7 = arith.addf %5, %6 : vector<1x1x256xf32>
    %cst_6 = arith.constant 1.000000e+00 : f32
    %8 = vector.broadcast %cst_6 : f32 to vector<1x1x256xf32>
    %9 = arith.divf %8, %7 : vector<1x1x256xf32>
    %10 = vector.broadcast %9 : vector<1x1x256xf32> to vector<1x64x256xf32>
    %11 = arith.mulf %0, %10 : vector<1x64x256xf32>
    %12 = vector.broadcast %1 : vector<1x64x1xf32> to vector<1x64x256xf32>
    %13 = arith.mulf %11, %12 : vector<1x64x256xf32>
    %c0_7 = arith.constant 0 : index
    %c0_8 = arith.constant 0 : index
    %c0_9 = arith.constant 0 : index
    %14 = vector.load %arg4[%c0_7, %c0_8, %c0_9] : memref<1x64x256xf32, #tpu.memory_space<vmem>>, vector<1x64x256xf32>
    tpu.vector_store %arg4[%c0_7, %c0_8, %c0_9], %13 {strides = array<i32>} : memref<1x64x256xf32, #tpu.memory_space<vmem>>, vector<1x64x256xf32>,
    return
  }
  func.func @transform_0(%arg0: i32, %arg1: i32) -> (i32, i32, i32) {
    %c0_i32 = arith.constant 0 : i32
    %c0_i32_0 = arith.constant 0 : i32
    return %arg0, %c0_i32, %arg1 : i32, i32, i32
  }
  func.func @transform_1(%arg0: i32, %arg1: i32) -> (i32, i32, i32) {
    %c0_i32 = arith.constant 0 : i32
    %c0_i32_0 = arith.constant 0 : i32
    %c0_i32_1 = arith.constant 0 : i32
    %c0_i32_2 = arith.constant 0 : i32
    return %c0_i32, %c0_i32_0, %c0_i32_1 : i32, i32, i32
  }
  func.func @transform_2(%arg0: i32, %arg1: i32) -> (i32, i32, i32) {
    %c0_i32 = arith.constant 0 : i32
    %c0_i32_0 = arith.constant 0 : i32
    return %arg0, %c0_i32, %arg1 : i32, i32, i32
  }
}

</mosaic_0001>

<llo_original>
// kernel: tpu_custom_call.1
$region0: #{tpu_custom_call.1}
  #allocation0 [shape = 'u32[]', space=smem, size = 0x4, offset = 0x4, fixed_abs, tag = 'smem constant byte address 0x4 - core index']
  #allocation1 [shape = 'u32[144,128]{1,0:T(1,128)}', space=vmem, size = 0x12000, scoped, tag = 'internal scratch']
  %s0 = inlined_call_operand.hbm [shape: f32[2,64,256], index: 0, kind: input, shape index: {}]
  %s1 = inlined_call_operand.vmem [shape: f32[1,64,1], index: 1, kind: input, shape index: {}]
  %s2 = inlined_call_operand.hbm [shape: f32[2,64,256], index: 2, kind: output, shape index: {}]
  %s3 = sld [smem:[#allocation0]]
  $region45: #{tpu_custom_call.1} parent=0
    _
  %s5 = ssub.s32 1, %s3
  %s6 = scalar_select 0, %s5, %s3
  $region1: #{tpu_custom_call.1} parent=0
    #allocation2 [shape = 'u8[131072]{0}', space=vmem, size = 0x20000, scoped, tag = 'input window, operand 0']
    #allocation3 [shape = 's32[2]{0}', space=sflag, size = 0x8, scoped, tag = 'scoped memory for tpu_custom_call.1']
    #allocation4 [shape = 's32[2]{0}', space=sflag, size = 0x8, scoped, tag = 'scoped memory for tpu_custom_call.1']
    #allocation5 [shape = 'u8[131072]{0}', space=vmem, size = 0x20000, scoped, tag = 'output window, operand 0']
    %7 = vsyncpa [#allocation3], 0
    %s8 = scalar_lea.sflag [#allocation3], 1
    %9 = vsyncpa %s8, 0
    %10 = vsyncpa [#allocation4], 0
    %s11 = scalar_lea.sflag [#allocation4], 1
    %12 = vsyncpa %s11, 0
    loop: start=0, step=1, limit=4
    $region2: #{tpu_custom_call.1} parent=1 // loop_pre_header
      _
    $region3: #{tpu_custom_call.1} parent=1 // loop_header
      %s14 = sphi 0, %s18
      %p15 = scmp.ge.s32.totalorder %s14, 4
      %s21 = sphi 0, %s33
      %s22 = sphi 0, %s29
      %s23 = sphi 0, %s21
      %s24 = sphi 0, %s22
      %s25 = sphi 0, %s23
      %s26 = sphi 0, %s24
      %s38 = sphi 0, %s40
      %s41 = sphi 0, %s38
      %s42 = sphi 0, %s41
      %s58 = sphi 0, %s42
      %s62 = sphi 0, %s62
      %s64 = sphi 0, %s62
      %s65 = sphi 0, %s64
      %s79 = sphi 0, %s65
      %s87 = sphi 0, %s89
      %s90 = sphi 0, %s87
      %s91 = sphi 0, %s90
      %s107 = sphi 0, %s91
    $region4: #{tpu_custom_call.1} parent=1 // loop_header_branch
      %17 = sbr.rel (%p15) target = $region8
    $region5: #{tpu_custom_call.1} parent=1 // loop_body
      %s19 = ssub.s32 %s14, 1
      %s20 = ssub.s32 %s14, 2
      %s27 = sadd.s32 1, %s22
      %p28 = scmp.ge.s32.totalorder %s27, 1
      %s29 = scalar_select %p28, 0, %s27
      %s30 = sadd.s32 1, %s21
      %s31 = scalar_select %p28, %s30, %s21
      %p32 = scmp.ge.s32.totalorder %s31, 2
      %s33 = scalar_select %p32, 0, %s31
      %s34 = ssub.s32 %s21, %s33
      %s35 = ssub.s32 %s22, %s29
      %s36 = sor.u32 %s34, %s35
      %p37 = scmp.eq.s32.totalorder %s36, 0
      %s39 = sadd.s32 %s38, 1
      %s40 = scalar_select %p37, %s38, %s39
      %p43 = pneg %p37
      %p44 = scmp.eq.s32.totalorder %s14, 1
      %p45 = por %p43, %p44
      %p46 = scmp.ne.s32.totalorder %s38, %s41
      %p47 = scmp.eq.s32.totalorder %s14, 0
      %p48 = por %p46, %p47
      %p49 = scmp.ne.s32.totalorder %s38, %s41
      %p50 = scmp.eq.s32.totalorder %s19, 1
      %p51 = por %p49, %p50
      %p52 = scmp.ne.s32.totalorder %s41, %s42
      %p53 = scmp.eq.s32.totalorder %s19, 0
      %p54 = por %p52, %p53
      %p55 = scmp.ne.s32.totalorder %s41, %s42
      %p56 = scmp.eq.s32.totalorder %s20, 1
      %p57 = por %p55, %p56
      %p59 = scmp.ne.s32.totalorder %s42, %s58
      %p60 = scmp.eq.s32.totalorder %s20, 0
      %p61 = por %p59, %p60
      %s63 = sadd.s32 %s62, 1
      %p66 = scmp.eq.s32.totalorder %s14, 1
      %p67 = scmp.ne.s32.totalorder %s62, %s64
      %p68 = scmp.eq.s32.totalorder %s14, 0
      %p69 = por %p67, %p68
      %p70 = scmp.ne.s32.totalorder %s62, %s64
      %p71 = scmp.eq.s32.totalorder %s19, 1
      %p72 = por %p70, %p71
      %p73 = scmp.ne.s32.totalorder %s64, %s65
      %p74 = scmp.eq.s32.totalorder %s19, 0
      %p75 = por %p73, %p74
      %p76 = scmp.ne.s32.totalorder %s64, %s65
      %p77 = scmp.eq.s32.totalorder %s20, 1
      %p78 = por %p76, %p77
      %p80 = scmp.ne.s32.totalorder %s65, %s79
      %p81 = scmp.eq.s32.totalorder %s20, 0
      %p82 = por %p80, %p81
      %s83 = ssub.s32 %s21, %s33
      %s84 = ssub.s32 %s22, %s29
      %s85 = sor.u32 %s83, %s84
      %p86 = scmp.eq.s32.totalorder %s85, 0
      %s88 = sadd.s32 %s87, 1
      %s89 = scalar_select %p86, %s87, %s88
      %p92 = pneg %p86
      %p93 = scmp.eq.s32.totalorder %s14, 1
      %p94 = por %p92, %p93
      %p95 = scmp.ne.s32.totalorder %s87, %s90
      %p96 = scmp.eq.s32.totalorder %s14, 0
      %p97 = por %p95, %p96
      %p98 = scmp.ne.s32.totalorder %s87, %s90
      %p99 = scmp.eq.s32.totalorder %s19, 1
      %p100 = por %p98, %p99
      %p101 = scmp.ne.s32.totalorder %s90, %s91
      %p102 = scmp.eq.s32.totalorder %s19, 0
      %p103 = por %p101, %p102
      %p104 = scmp.ne.s32.totalorder %s90, %s91
      %p105 = scmp.eq.s32.totalorder %s20, 1
      %p106 = por %p104, %p105
      %p108 = scmp.ne.s32.totalorder %s91, %s107
      %p109 = scmp.eq.s32.totalorder %s20, 0
      %p110 = por %p108, %p109
      %p111 = scmp.le.s32.totalorder 1, %s14
      %p112 = scmp.lt.s32.totalorder %s14, 3
      %p113 = pnand %p111, %p112
      %p114 = pneg %p113
      // Predicated region
      $region9: #{tpu_custom_call.1} parent=5 // pred_check
        _
      $region10: #{tpu_custom_call.1} parent=5 // pred_check_branch
        %116 = sbr.rel (%p113) target = $region12
      $region11: #{tpu_custom_call.1} parent=5 // pred_region
        %s117 = ssub.s32 %s14, 1
        // Predicated region
        $region13: #{tpu_custom_call.1} parent=11 // pred_check
          %p118 = pneg %p75
        $region14: #{tpu_custom_call.1} parent=11 // pred_check_branch
          %120 = sbr.rel (%p118) target = $region16
        $region15: #{tpu_custom_call.1} parent=11 // pred_region
          _
        $region16: #{tpu_custom_call.1} parent=11 // pred_fallthru
          _
      $region12: #{tpu_custom_call.1} parent=5 // pred_fallthru
        _
      %p121 = scmp.lt.s32.totalorder %s14, 2
      // Predicated region
      $region17: #{tpu_custom_call.1} parent=5 // pred_check
        %p122 = pneg %p121
      $region18: #{tpu_custom_call.1} parent=5 // pred_check_branch
        %124 = sbr.rel (%p122) target = $region20
      $region19: #{tpu_custom_call.1} parent=5 // pred_region
        // Predicated region
        $region21: #{tpu_custom_call.1} parent=19 // pred_check
          %p125 = pneg %p48
        $region22: #{tpu_custom_call.1} parent=19 // pred_check_branch
          %127 = sbr.rel (%p125) target = $region24
        $region23: #{tpu_custom_call.1} parent=19 // pred_region
          %s128 = sand.u32 %s38, 1
          %s129 = scalar_lea.sflag [#allocation3], %s128
          %s130 = sand.u32 %s38, 1
          %s131 = smul.addr %s130, 128
          %s132 = scalar_lea.vmem [#allocation2], %s131
          %s133 = smul.u32 2, %s22
          %s135 = ssub.s32 2048, 2048
          %136 = vsyncadd %s129, %s135
          %s137 = smul.addr %s21, 16
          %s138 = sadd.s32 %s133, %s137
          %s139 = smul.addr %s138, 128
          %s140 = scalar_lea.hbm %s0, %s139
          %s141 = sshll.u32 %s132, 4
          %s142 = int_to_ptr.vmem [resolvable:$true] %s141
          %147 = dma.hbm_to_vmem [thread:$0]  %s140, 2048, %s142, %s129, 256, 256, 16
        $region24: #{tpu_custom_call.1} parent=19 // pred_fallthru
          _
      $region20: #{tpu_custom_call.1} parent=5 // pred_fallthru
        _
      %p148 = scmp.le.s32.totalorder 1, %s14
      %p149 = scmp.lt.s32.totalorder %s14, 3
      %p150 = pnand %p148, %p149
      %p151 = pneg %p150
      // Predicated region
      $region25: #{tpu_custom_call.1} parent=5 // pred_check
        _
      $region26: #{tpu_custom_call.1} parent=5 // pred_check_branch
        %153 = sbr.rel (%p150) target = $region28
      $region27: #{tpu_custom_call.1} parent=5 // pred_region
        %s154 = ssub.s32 %s14, 1
        %s155 = sand.u32 %s41, 1
        %s156 = scalar_lea.sflag [#allocation3], %s155
        %s157 = sand.u32 %s41, 1
        %s158 = smul.addr %s157, 128
        %s159 = scalar_lea.vmem [#allocation2], %s158
        // Predicated region
        $region29: #{tpu_custom_call.1} parent=27 // pred_check
          %p160 = pneg %p54
        $region30: #{tpu_custom_call.1} parent=27 // pred_check_branch
          %162 = sbr.rel (%p160) target = $region32
        $region31: #{tpu_custom_call.1} parent=27 // pred_region
          %163 = dma.done %s156, 2048
        $region32: #{tpu_custom_call.1} parent=27 // pred_fallthru
          _
        %s164 = sand.u32 %s41, 1
        %s165 = scalar_lea.sflag [#allocation3], %s164
        %s166 = sand.u32 %s41, 1
        %s167 = smul.addr %s166, 128
        %s168 = scalar_lea.vmem [#allocation2], %s167
        %p169 = pneg %p54
        %p170 = pneg %p51
        %p171 = pneg %p75
        %p172 = pneg %p72
        %p173 = pneg %p103
        %p174 = pneg %p100
        %s175 = sand.u32 %s90, 1
        %s176 = scalar_lea.sflag [#allocation4], %s175
        %s177 = sand.u32 %s90, 1
        %s178 = smul.addr %s177, 128
        %s179 = scalar_lea.vmem [#allocation5], %s178
        %s180 = smul.u32 2, %s24
        %s181 = smul.u32 2, %s24
        %v182 = vld [vmem:[%s159] sm:$0xff]
        %v183 = vld [vmem:[%s159 + $0x8] sm:$0xff]
        %v184 = vld [vmem:[%s159 + $0x10] sm:$0xff]
        %v185 = vld [vmem:[%s159 + $0x18] sm:$0xff]
        %v186 = vld [vmem:[%s159 + $0x20] sm:$0xff]
        %v187 = vld [vmem:[%s159 + $0x28] sm:$0xff]
        %v188 = vld [vmem:[%s159 + $0x30] sm:$0xff]
        %v189 = vld [vmem:[%s159 + $0x38] sm:$0xff]
        %v190 = vld [vmem:[%s159 + $0x40] sm:$0xff]
        %v191 = vld [vmem:[%s159 + $0x48] sm:$0xff]
        %v192 = vld [vmem:[%s159 + $0x50] sm:$0xff]
        %v193 = vld [vmem:[%s159 + $0x58] sm:$0xff]
        %v194 = vld [vmem:[%s159 + $0x60] sm:$0xff]
        %v195 = vld [vmem:[%s159 + $0x68] sm:$0xff]
        %v196 = vld [vmem:[%s159 + $0x70] sm:$0xff]
        %v197 = vld [vmem:[%s159 + $0x78] sm:$0xff]
        %v198 = vld [vmem:[%s1] sm:$0xff]
        %v199 = vld [vmem:[%s1 + $0x8] sm:$0xff]
        %v200 = vld [vmem:[%s1 + $0x10] sm:$0xff]
        %v201 = vld [vmem:[%s1 + $0x18] sm:$0xff]
        %v202 = vld [vmem:[%s1 + $0x20] sm:$0xff]
        %v203 = vld [vmem:[%s1 + $0x28] sm:$0xff]
        %v204 = vld [vmem:[%s1 + $0x30] sm:$0xff]
        %v205 = vld [vmem:[%s1 + $0x38] sm:$0xff]
        %v206 = vmul.f32 %v182, %v182
        %v207 = vmul.f32 %v183, %v183
        %v208 = vmul.f32 %v184, %v184
        %v209 = vmul.f32 %v185, %v185
        %v210 = vmul.f32 %v186, %v186
        %v211 = vmul.f32 %v187, %v187
        %v212 = vmul.f32 %v188, %v188
        %v213 = vmul.f32 %v189, %v189
        %v214 = vmul.f32 %v190, %v190
        %v215 = vmul.f32 %v191, %v191
        %v216 = vmul.f32 %v192, %v192
        %v217 = vmul.f32 %v193, %v193
        %v218 = vmul.f32 %v194, %v194
        %v219 = vmul.f32 %v195, %v195
        %v220 = vmul.f32 %v196, %v196
        %v221 = vmul.f32 %v197, %v197
        %v222 = vadd.f32 %v206, %v208
        %v223 = vadd.f32 %v222, %v210
        %v224 = vadd.f32 %v223, %v212
        %v225 = vadd.f32 %v224, %v214
        %v226 = vadd.f32 %v225, %v216
        %v227 = vadd.f32 %v226, %v218
        %v228 = vadd.f32 %v227, %v220
        %v229 = vrot.slane %v228, 4
        %v230 = vadd.f32 %v228, %v229
        %v231 = vrot.slane %v230, 2
        %v232 = vadd.f32 %v230, %v231
        %v233 = vrot.slane %v232, 1
        %v234 = vadd.f32 %v232, %v233
        %v235 = vadd.f32 %v207, %v209
        %v236 = vadd.f32 %v235, %v211
        %v237 = vadd.f32 %v236, %v213
        %v238 = vadd.f32 %v237, %v215
        %v239 = vadd.f32 %v238, %v217
        %v240 = vadd.f32 %v239, %v219
        %v241 = vadd.f32 %v240, %v221
        %v242 = vrot.slane %v241, 4
        %v243 = vadd.f32 %v241, %v242
        %v244 = vrot.slane %v243, 2
        %v245 = vadd.f32 %v243, %v244
        %v246 = vrot.slane %v245, 1
        %v247 = vadd.f32 %v245, %v246
        %v248 = vrsqrt.pop %v234
        %v249 = vmul.f32 %v234, %v248
        %vm250 = vcmp.eq.f32.partialorder %v234, inf
        %v251 = vsel %vm250, %v234, %v249
        %vm252 = vcmp.eq.f32.partialorder %v234, 0.0
        %v253 = vand.u32 %v234, 2147483648
        %v254 = vsel %vm252, %v253, %v251
        %v255 = vrsqrt.pop %v247
        %v256 = vmul.f32 %v247, %v255
        %vm257 = vcmp.eq.f32.partialorder %v247, inf
        %v258 = vsel %vm257, %v247, %v256
        %vm259 = vcmp.eq.f32.partialorder %v247, 0.0
        %v260 = vand.u32 %v247, 2147483648
        %v261 = vsel %vm259, %v260, %v258
        %v262 = vadd.f32 %v254, 1e-10
        %v263 = vadd.f32 %v261, 1e-10
        %v264 = vrcp.pop %v262
        %v265 = vmul.f32 1.0, %v264
        %v266 = vrcp.pop %v263
        %v267 = vmul.f32 1.0, %v266
        %v268 = vmul.f32 %v182, %v265
        %v269 = vmul.f32 %v183, %v267
        %v270 = vmul.f32 %v184, %v265
        %v271 = vmul.f32 %v185, %v267
        %v272 = vmul.f32 %v186, %v265
        %v273 = vmul.f32 %v187, %v267
        %v274 = vmul.f32 %v188, %v265
        %v275 = vmul.f32 %v189, %v267
        %v276 = vmul.f32 %v190, %v265
        %v277 = vmul.f32 %v191, %v267
        %v278 = vmul.f32 %v192, %v265
        %v279 = vmul.f32 %v193, %v267
        %v280 = vmul.f32 %v194, %v265
        %v281 = vmul.f32 %v195, %v267
        %v282 = vmul.f32 %v196, %v265
        %v283 = vmul.f32 %v197, %v267
        %285 = vset.pattern.permute.xlu0 0
        %286 = vperm.xlu0 %285, %v198
        %v287 = vpop.permute.xlu0 %286
        %290 = vset.pattern.permute.xlu0 0
        %291 = vperm.xlu0 %290, %v199
        %v292 = vpop.permute.xlu0 %291
        %295 = vset.pattern.permute.xlu0 0
        %296 = vperm.xlu0 %295, %v200
        %v297 = vpop.permute.xlu0 %296
        %300 = vset.pattern.permute.xlu0 0
        %301 = vperm.xlu0 %300, %v201
        %v302 = vpop.permute.xlu0 %301
        %305 = vset.pattern.permute.xlu0 0
        %306 = vperm.xlu0 %305, %v202
        %v307 = vpop.permute.xlu0 %306
        %310 = vset.pattern.permute.xlu0 0
        %311 = vperm.xlu0 %310, %v203
        %v312 = vpop.permute.xlu0 %311
        %315 = vset.pattern.permute.xlu0 0
        %316 = vperm.xlu0 %315, %v204
        %v317 = vpop.permute.xlu0 %316
        %320 = vset.pattern.permute.xlu0 0
        %321 = vperm.xlu0 %320, %v205
        %v322 = vpop.permute.xlu0 %321
        %v324 = vmul.f32 %v268, %v287
        %v325 = vmul.f32 %v269, %v287
        %v326 = vmul.f32 %v270, %v292
        %v327 = vmul.f32 %v271, %v292
        %v328 = vmul.f32 %v272, %v297
        %v329 = vmul.f32 %v273, %v297
        %v330 = vmul.f32 %v274, %v302
        %v331 = vmul.f32 %v275, %v302
        %v332 = vmul.f32 %v276, %v307
        %v333 = vmul.f32 %v277, %v307
        %v334 = vmul.f32 %v278, %v312
        %v335 = vmul.f32 %v279, %v312
        %v336 = vmul.f32 %v280, %v317
        %v337 = vmul.f32 %v281, %v317
        %v338 = vmul.f32 %v282, %v322
        %v339 = vmul.f32 %v283, %v322
        %340 = vst [vmem:[%s179] sm:$0xff] %v324
        %341 = vst [vmem:[%s179 + $0x8] sm:$0xff] %v325
        %342 = vst [vmem:[%s179 + $0x10] sm:$0xff] %v326
        %343 = vst [vmem:[%s179 + $0x18] sm:$0xff] %v327
        %344 = vst [vmem:[%s179 + $0x20] sm:$0xff] %v328
        %345 = vst [vmem:[%s179 + $0x28] sm:$0xff] %v329
        %346 = vst [vmem:[%s179 + $0x30] sm:$0xff] %v330
        %347 = vst [vmem:[%s179 + $0x38] sm:$0xff] %v331
        %348 = vst [vmem:[%s179 + $0x40] sm:$0xff] %v332
        %349 = vst [vmem:[%s179 + $0x48] sm:$0xff] %v333
        %350 = vst [vmem:[%s179 + $0x50] sm:$0xff] %v334
        %351 = vst [vmem:[%s179 + $0x58] sm:$0xff] %v335
        %352 = vst [vmem:[%s179 + $0x60] sm:$0xff] %v336
        %353 = vst [vmem:[%s179 + $0x68] sm:$0xff] %v337
        %354 = vst [vmem:[%s179 + $0x70] sm:$0xff] %v338
        %355 = vst [vmem:[%s179 + $0x78] sm:$0xff] %v339
        %s356 = sand.u32 %s90, 1
        %s357 = scalar_lea.sflag [#allocation4], %s356
        %s358 = sand.u32 %s90, 1
        %s359 = smul.addr %s358, 128
        %s360 = scalar_lea.vmem [#allocation5], %s359
        // Predicated region
        $region33: #{tpu_custom_call.1} parent=27 // pred_check
          %p361 = pneg %p100
        $region34: #{tpu_custom_call.1} parent=27 // pred_check_branch
          %363 = sbr.rel (%p361) target = $region36
        $region35: #{tpu_custom_call.1} parent=27 // pred_region
          %s364 = smul.u32 2, %s24
          %s366 = ssub.s32 2048, 2048
          %367 = vsyncadd %s357, %s366
          %s368 = smul.addr %s23, 16
          %s369 = sadd.s32 %s364, %s368
          %s370 = smul.addr %s369, 128
          %s371 = scalar_lea.hbm %s2, %s370
          %s372 = sshll.u32 %s360, 4
          %s373 = int_to_ptr.vmem [resolvable:$true] %s372
          %378 = dma.vmem_to_hbm [thread:$0]  %s373, 2048, %s371, %s357, 256, 256, 16
        $region36: #{tpu_custom_call.1} parent=27 // pred_fallthru
          _
      $region28: #{tpu_custom_call.1} parent=5 // pred_fallthru
        _
      %p379 = scmp.le.s32.totalorder 2, %s14
      // Predicated region
      $region37: #{tpu_custom_call.1} parent=5 // pred_check
        %p380 = pneg %p379
      $region38: #{tpu_custom_call.1} parent=5 // pred_check_branch
        %382 = sbr.rel (%p380) target = $region40
      $region39: #{tpu_custom_call.1} parent=5 // pred_region
        %s383 = ssub.s32 %s14, 2
        // Predicated region
        $region41: #{tpu_custom_call.1} parent=39 // pred_check
          %p384 = pneg %p106
        $region42: #{tpu_custom_call.1} parent=39 // pred_check_branch
          %386 = sbr.rel (%p384) target = $region44
        $region43: #{tpu_custom_call.1} parent=39 // pred_region
          %s387 = sand.u32 %s91, 1
          %s388 = scalar_lea.sflag [#allocation4], %s387
          %s389 = sand.u32 %s91, 1
          %s390 = smul.addr %s389, 128
          %s391 = scalar_lea.vmem [#allocation5], %s390
          %392 = dma.done %s388, 2048
        $region44: #{tpu_custom_call.1} parent=39 // pred_fallthru
          _
      $region40: #{tpu_custom_call.1} parent=5 // pred_fallthru
        _
    $region6: #{tpu_custom_call.1} parent=1 // loop_footer
      %s18 = sadd.s32 1, %s14
    $region7: #{tpu_custom_call.1} parent=1 // loop_footer_branch
      %13 = sbr.rel target = $region3
    $region8: #{tpu_custom_call.1} parent=1 // loop_exit
      _
    %393 = vsyncpa [#allocation3], 1
    %s394 = scalar_lea.sflag [#allocation3], 1
    %395 = vsyncpa %s394, 1
    %396 = vsyncpa [#allocation4], 1
    %s397 = scalar_lea.sflag [#allocation4], 1
    %398 = vsyncpa %s397, 1

</llo_original>
